<compile_context>
chip_gen: v6e
topology: v6e:2x2x1
jax: 0.10.0
libtpu: 0.0.40
codegen_flags: <defaults>
</compile_context>

<pallas_src>
import functools

import jax
import jax.numpy as jnp
from jax.experimental import pallas as pl
from jax.experimental.pallas import tpu as pltpu

TEMPERATURE = 2.0
_LANE = 128
_SUBLANE = 8


def _round_up(x, m):
    return (x + m - 1) // m * m


def _tpu_vmem_and_cores():
    """Returns (physical VMEM bytes per core, TensorCores per device)."""
    vmem_bytes = 64 * 1024 * 1024          # conservative (v7x-sized) fallback
    num_tc = 1
    try:
        vmem_bytes = int(pltpu.get_tpu_info().vmem_capacity_bytes)
    except Exception:
        pass
    try:
        kind = jax.devices()[0].device_kind.lower()
        # Megacore (v4 / v5p) and v7x devices expose 2 TensorCores per device.
        if ("v4" in kind) or ("v5p" in kind) or ("v7" in kind):
            num_tc = 2
    except Exception:
        pass
    return vmem_bytes, num_tc


def _pick_tile_rows(rows, classes, in_bytes, vmem_limit_bytes):
    # Per-row VMEM footprint: 2 inputs x 2 pipeline buffers in the input dtype
    # plus ~8 live (tile_rows, classes) f32 temporaries inside the fused body
    # (a conservative over-estimate; the compiler reuses several of them).
    per_row = classes * (4 * in_bytes + 8 * 4)
    budget = (vmem_limit_bytes * 7) // 10
    t = max(_SUBLANE, budget // max(per_row, 1))
    t = min(int(t), 16384, _round_up(rows, _SUBLANE))
    return max(_SUBLANE, (t // _SUBLANE) * _SUBLANE)


def _rkl_tile_kernel(rows_total, tile_rows, tiles_per_split,
                     ys_ref, yt_ref, out_ref):
    """Accumulate sum_rows( sum_c p_s * (log p_s - log p_t) ) for one row tile."""
    c = pl.program_id(0)   # split index (outer, "parallel")
    t = pl.program_id(1)   # row-tile within the split (inner, "arbitrary")

    @pl.when(t == 0)
    def _init():
        out_ref[...] = jnp.zeros_like(out_ref)

    inv_t = 1.0 / TEMPERATURE
    ys = ys_ref[...]
    yt = yt_ref[...]
    if jnp.issubdtype(ys.dtype, jnp.floating):
        # Scale by 0.5 (exact) in the input dtype first: packed 2x rate for bf16.
        zs = (ys * jnp.asarray(inv_t, dtype=ys.dtype)).astype(jnp.float32)
        zt = (yt * jnp.asarray(inv_t, dtype=yt.dtype)).astype(jnp.float32)
    else:
        zs = ys.astype(jnp.float32) * inv_t
        zt = yt.astype(jnp.float32) * inv_t

    a_s = zs - jnp.max(zs, axis=-1, keepdims=True)
    a_t = zt - jnp.max(zt, axis=-1, keepdims=True)
    es = jnp.exp(a_s)
    # TODO(synk): on v7x (VALU-slot bound) the three lane reductions below could
    # be offloaded to the idle MXU via a stacked jnp.dot against a ones matrix;
    # kept on the XLU here for simplicity/portability.
    ss = jnp.sum(es, axis=-1, keepdims=True)                    # (tile_rows, 1)
    st = jnp.sum(jnp.exp(a_t), axis=-1, keepdims=True)          # (tile_rows, 1)

    inner = jnp.sum(es * (a_s - a_t), axis=-1, keepdims=True)   # (tile_rows, 1)
    per_row = inner / ss - jnp.log(ss) + jnp.log(st)            # (tile_rows, 1)

    # Mask rows beyond the true row count.  The ragged tail tile (and any
    # clamped duplicate tile of an uneven split) contains unspecified data;
    # the select discards it (do NOT switch to multiply-by-zero masking).
    tile_idx = c * tiles_per_split + t
    row_ids = tile_idx * tile_rows + jax.lax.broadcasted_iota(
        jnp.int32, (tile_rows, 1), 0)
    per_row = jnp.where(row_ids < rows_total, per_row, 0.0)

    # Accumulate this tile's partial sum into the split's resident output block.
    out_ref[...] += jnp.sum(per_row)


def rkl_loss(y_s, y_t, mode="classification", tile_rows=None):
    """Pallas implementation of RKL.forward (T = 2). Returns a scalar."""
    if mode == "regression":
        # TODO(synk): regression branch (plain MSE on flattened logits) is a
        # trivial elementwise mean; kept as plain JAX, not the Pallas hot path.
        d = ((y_s / TEMPERATURE).reshape(-1).astype(jnp.float32)
             - (y_t / TEMPERATURE).reshape(-1).astype(jnp.float32))
        return 0.1 * jnp.mean(d * d)

    assert y_s.shape == y_t.shape
    classes = y_s.shape[-1]
    ys2d = y_s.reshape(-1, classes)
    yt2d = y_t.reshape(-1, classes)
    rows = ys2d.shape[0]
    in_bytes = jnp.dtype(ys2d.dtype).itemsize

    vmem_cap, num_tc = _tpu_vmem_and_cores()
    # ~96 MiB on 128 MiB-VMEM chips (v5e/v6e), ~40 MiB on 64 MiB chips (v7x).
    vmem_limit = max(32 * 1024 * 1024,
                     min(vmem_cap - 24 * 1024 * 1024, 96 * 1024 * 1024))

    if tile_rows is None:
        tile_rows = _pick_tile_rows(rows, classes, in_bytes, vmem_limit)
    tile_rows = max(_SUBLANE, (int(tile_rows) // _SUBLANE) * _SUBLANE)

    n_tiles = -(-rows // tile_rows)
    splits = num_tc if n_tiles >= num_tc else 1
    tiles_per_split = -(-n_tiles // splits)
    last_block = n_tiles - 1

    kernel = functools.partial(_rkl_tile_kernel, rows, tile_rows, tiles_per_split)

    # Clamp the block index so an uneven split never issues an out-of-range
    # block DMA; the in-kernel row mask zeroes any duplicated tile.
    def in_map(c, t, tps=tiles_per_split, last=last_block):
        return (jnp.minimum(c * tps + t, last), 0)

    out = pl.pallas_call(
        kernel,
        out_shape=jax.ShapeDtypeStruct((splits * _SUBLANE, _LANE), jnp.float32),
        grid_spec=pltpu.PrefetchScalarGridSpec(
            num_scalar_prefetch=0,
            grid=(splits, tiles_per_split),
            in_specs=[
                # Full-extent last dim (= classes): legal even when not a
                # multiple of 128, so no class-axis padding is needed.
                pl.BlockSpec((tile_rows, classes), in_map),
                pl.BlockSpec((tile_rows, classes), in_map),
            ],
            out_specs=pl.BlockSpec((_SUBLANE, _LANE), lambda c, t: (c, 0)),
        ),
        compiler_params=pltpu.CompilerParams(
            dimension_semantics=("parallel", "arbitrary"),
            vmem_limit_bytes=int(vmem_limit),
        ),
        cost_estimate=pl.CostEstimate(
            flops=int(13 * rows * classes),
            transcendentals=int(2 * rows * classes),
            bytes_accessed=int(2 * rows * classes * in_bytes
                               + splits * _SUBLANE * _LANE * 4),
        ),
    )(ys2d, yt2d)

    # One partial sum per split lives at element [c*8, 0] of the output slab.
    total = jnp.sum(out[::_SUBLANE, 0])
    return 0.1 * (total / rows)


def _reference(y_s, y_t):
    zs = y_s.astype(jnp.float32) / TEMPERATURE
    zt = y_t.astype(jnp.float32) / TEMPERATURE
    p_s = jax.nn.softmax(zs, axis=-1)
    p_s1 = jax.nn.log_softmax(zs, axis=-1)
    p_t = jax.nn.log_softmax(zt, axis=-1)
    loss = (jnp.mean(jnp.sum(p_s1 * p_s, axis=-1))
            - jnp.mean(jnp.sum(p_t * p_s, axis=-1)))
    return 0.1 * loss


if __name__ == "__main__":
    key = jax.random.PRNGKey(0)
    k1, k2 = jax.random.split(key)
    # Small logits: batch=2, seq=8, classes=32 -> 16 rows of 32 classes.
    y_s = jax.random.normal(k1, (2, 8, 32), dtype=jnp.float32)
    y_t = jax.random.normal(k2, (2, 8, 32), dtype=jnp.float32)

    out = jax.block_until_ready(rkl_loss(y_s, y_t))
    ref = jax.block_until_ready(_reference(y_s, y_t))
    assert jnp.allclose(out, ref, atol=1e-5, rtol=1e-5), (out, ref)

    # Second check: force tiny tiles so the multi-tile / multi-split /
    # ragged-tail-tile (unpadded rows) paths are exercised.
    k3, k4 = jax.random.split(k2)
    y_s2 = jax.random.normal(k3, (2, 9, 32), dtype=jnp.float32)
    y_t2 = jax.random.normal(k4, (2, 9, 32), dtype=jnp.float32)
    out2 = jax.block_until_ready(rkl_loss(y_s2, y_t2, tile_rows=8))
    ref2 = jax.block_until_ready(_reference(y_s2, y_t2))
    assert jnp.allclose(out2, ref2, atol=1e-5, rtol=1e-5), (out2, ref2)

    # Third check: bf16 inputs exercise the in-dtype x0.5 scale path.
    y_s3 = y_s.astype(jnp.bfloat16)
    y_t3 = y_t.astype(jnp.bfloat16)
    out3 = jax.block_until_ready(rkl_loss(y_s3, y_t3))
    ref3 = jax.block_until_ready(_reference(y_s3, y_t3))
    assert jnp.allclose(out3, ref3, atol=2e-3, rtol=2e-3), (out3, ref3)

    print("KERNEL_OK")
</pallas_src>

<mosaic_0001>
module attributes {stable_mosaic.version = 11 : i64} {
  func.func @_rkl_tile_kernel(%arg0: i32, %arg1: i32, %arg2: memref<16x32xf32, #tpu.memory_space<vmem>>, %arg3: memref<16x32xf32, #tpu.memory_space<vmem>>, %arg4: memref<8x128xf32, #tpu.memory_space<vmem>>) attributes {dimension_semantics = [#tpu.dimension_semantics<parallel>, #tpu.dimension_semantics<arbitrary>], iteration_bounds = array<i64: 1, 1>, scalar_prefetch = 0 : i64, scratch_operands = 0 : i64, tpu.core_type = #tpu.core_type<tc>, window_params = [{transform_indices = @transform_0, window_bounds = array<i64: 16, 32>}, {transform_indices = @transform_1, window_bounds = array<i64: 16, 32>}, {transform_indices = @transform_2, window_bounds = array<i64: 8, 128>}]} {
    %c0_i32 = arith.constant 0 : i32
    %0 = arith.cmpi eq, %arg1, %c0_i32 : i32
    %1 = arith.extui %0 : i1 to i32
    %c0_i32_0 = arith.constant 0 : i32
    %2 = arith.cmpi ne, %1, %c0_i32_0 : i32
    scf.if %2 {
      %cst_17 = arith.constant 0.000000e+00 : f32
      %50 = vector.broadcast %cst_17 : f32 to vector<8x128xf32>
      %c0_18 = arith.constant 0 : index
      %c0_19 = arith.constant 0 : index
      %51 = vector.load %arg4[%c0_18, %c0_19] : memref<8x128xf32, #tpu.memory_space<vmem>>, vector<8x128xf32>
      tpu.vector_store %arg4[%c0_18, %c0_19], %50 {strides = array<i32>} : memref<8x128xf32, #tpu.memory_space<vmem>>, vector<8x128xf32>,
    } else {
    }
    %c0 = arith.constant 0 : index
    %c0_1 = arith.constant 0 : index
    %3 = vector.load %arg2[%c0, %c0_1] : memref<16x32xf32, #tpu.memory_space<vmem>>, vector<16x32xf32>
    %c0_2 = arith.constant 0 : index
    %c0_3 = arith.constant 0 : index
    %4 = vector.load %arg3[%c0_2, %c0_3] : memref<16x32xf32, #tpu.memory_space<vmem>>, vector<16x32xf32>
    %cst = arith.constant 5.000000e-01 : f32
    %5 = vector.broadcast %cst : f32 to vector<16x32xf32>
    %6 = arith.mulf %3, %5 : vector<16x32xf32>
    %cst_4 = arith.constant 5.000000e-01 : f32
    %7 = vector.broadcast %cst_4 : f32 to vector<16x32xf32>
    %8 = arith.mulf %4, %7 : vector<16x32xf32>
    %cst_5 = arith.constant dense<0xFF800000> : vector<16xf32>
    %9 = vector.multi_reduction <maximumf>, %6, %cst_5 [1] : vector<16x32xf32> to vector<16xf32>
    %10 = vector.shape_cast %9 : vector<16xf32> to vector<16x1xf32>
    %11 = vector.broadcast %10 : vector<16x1xf32> to vector<16x32xf32>
    %12 = arith.subf %6, %11 : vector<16x32xf32>
    %cst_6 = arith.constant dense<0xFF800000> : vector<16xf32>
    %13 = vector.multi_reduction <maximumf>, %8, %cst_6 [1] : vector<16x32xf32> to vector<16xf32>
    %14 = vector.shape_cast %13 : vector<16xf32> to vector<16x1xf32>
    %15 = vector.broadcast %14 : vector<16x1xf32> to vector<16x32xf32>
    %16 = arith.subf %8, %15 : vector<16x32xf32>
    %17 = math.exp %12 : vector<16x32xf32>
    %cst_7 = arith.constant dense<0.000000e+00> : vector<16xf32>
    %18 = vector.multi_reduction <add>, %17, %cst_7 [1] : vector<16x32xf32> to vector<16xf32>
    %19 = vector.shape_cast %18 : vector<16xf32> to vector<16x1xf32>
    %20 = math.exp %16 : vector<16x32xf32>
    %cst_8 = arith.constant dense<0.000000e+00> : vector<16xf32>
    %21 = vector.multi_reduction <add>, %20, %cst_8 [1] : vector<16x32xf32> to vector<16xf32>
    %22 = vector.shape_cast %21 : vector<16xf32> to vector<16x1xf32>
    %23 = arith.subf %12, %16 : vector<16x32xf32>
    %24 = arith.mulf %17, %23 : vector<16x32xf32>
    %cst_9 = arith.constant dense<0.000000e+00> : vector<16xf32>
    %25 = vector.multi_reduction <add>, %24, %cst_9 [1] : vector<16x32xf32> to vector<16xf32>
    %26 = vector.shape_cast %25 : vector<16xf32> to vector<16x1xf32>
    %27 = arith.divf %26, %19 : vector<16x1xf32>
    %28 = math.log %19 : vector<16x1xf32>
    %29 = arith.subf %27, %28 : vector<16x1xf32>
    %30 = math.log %22 : vector<16x1xf32>
    %31 = arith.addf %29, %30 : vector<16x1xf32>
    %c1_i32 = arith.constant 1 : i32
    %32 = arith.muli %arg0, %c1_i32 : i32
    %33 = arith.addi %32, %arg1 : i32
    %c16_i32 = arith.constant 16 : i32
    %34 = arith.muli %33, %c16_i32 : i32
    %35 = tpu.iota {dimensions = array<i32: 0>} : vector<16x1xi32>
    %36 = vector.broadcast %34 : i32 to vector<16x1xi32>
    %37 = arith.addi %36, %35 : vector<16x1xi32>
    %c16_i32_10 = arith.constant 16 : i32
    %38 = vector.broadcast %c16_i32_10 : i32 to vector<16x1xi32>
    %39 = arith.cmpi slt, %37, %38 : vector<16x1xi32>
    %cst_11 = arith.constant 0.000000e+00 : f32
    %40 = vector.broadcast %cst_11 : f32 to vector<16x1xf32>
    %41 = arith.select %39, %31, %40 : vector<16x1xi1>, vector<16x1xf32>
    %c0_12 = arith.constant 0 : index
    %c0_13 = arith.constant 0 : index
    %42 = vector.load %arg4[%c0_12, %c0_13] : memref<8x128xf32, #tpu.memory_space<vmem>>, vector<8x128xf32>
    %43 = vector.shape_cast %41 : vector<16x1xf32> to vector<1x16x1xf32>
    %cst_14 = arith.constant dense<0.000000e+00> : vector<1xf32>
    %44 = vector.multi_reduction <add>, %43, %cst_14 [1, 2] : vector<1x16x1xf32> to vector<1xf32>
    %45 = vector.shape_cast %44 : vector<1xf32> to vector<1x1x1xf32>
    %46 = vector.extract %45[0, 0, 0] : f32 from vector<1x1x1xf32>
    %47 = vector.broadcast %46 : f32 to vector<8x128xf32>
    %48 = arith.addf %42, %47 : vector<8x128xf32>
    %c0_15 = arith.constant 0 : index
    %c0_16 = arith.constant 0 : index
    %49 = vector.load %arg4[%c0_15, %c0_16] : memref<8x128xf32, #tpu.memory_space<vmem>>, vector<8x128xf32>
    tpu.vector_store %arg4[%c0_15, %c0_16], %48 {strides = array<i32>} : memref<8x128xf32, #tpu.memory_space<vmem>>, vector<8x128xf32>,
    return
  }
  func.func @transform_0(%arg0: i32, %arg1: i32) -> (i32, i32) {
    %c1_i32 = arith.constant 1 : i32
    %0 = arith.muli %arg0, %c1_i32 : i32
    %1 = arith.addi %0, %arg1 : i32
    %c0_i32 = arith.constant 0 : i32
    %2 = arith.minsi %1, %c0_i32 : i32
    %c0_i32_0 = arith.constant 0 : i32
    %c0_i32_1 = arith.constant 0 : i32
    return %2, %c0_i32_0 : i32, i32
  }
  func.func @transform_1(%arg0: i32, %arg1: i32) -> (i32, i32) {
    %c1_i32 = arith.constant 1 : i32
    %0 = arith.muli %arg0, %c1_i32 : i32
    %1 = arith.addi %0, %arg1 : i32
    %c0_i32 = arith.constant 0 : i32
    %2 = arith.minsi %1, %c0_i32 : i32
    %c0_i32_0 = arith.constant 0 : i32
    %c0_i32_1 = arith.constant 0 : i32
    return %2, %c0_i32_0 : i32, i32
  }
  func.func @transform_2(%arg0: i32, %arg1: i32) -> (i32, i32) {
    %c0_i32 = arith.constant 0 : i32
    %c0_i32_0 = arith.constant 0 : i32
    return %arg0, %c0_i32 : i32, i32
  }
}

</mosaic_0001>

<llo_original>
// kernel: tpu_custom_call.1
$region0: #{tpu_custom_call.1}
  #allocation0 [shape = 'u32[]', space=smem, size = 0x4, offset = 0x4, fixed_abs, tag = 'smem constant byte address 0x4 - core index']
  #allocation1 [shape = 'u32[144,128]{1,0:T(1,128)}', space=vmem, size = 0x12000, scoped, tag = 'internal scratch']
  %s0 = inlined_call_operand.hbm [shape: f32[16,32], index: 0, kind: input, shape index: {}]
  %s1 = inlined_call_operand.hbm [shape: f32[16,32], index: 1, kind: input, shape index: {}]
  %s2 = inlined_call_operand.hbm [shape: f32[8,128], index: 2, kind: output, shape index: {}]
  %s3 = sld [smem:[#allocation0]]
  $region30: #{tpu_custom_call.1} parent=0
    _
  %s5 = ssub.s32 1, %s3
  %s6 = scalar_select 0, %s5, %s3
  $region1: #{tpu_custom_call.1} parent=0
    #allocation2 [shape = 'u8[8192]{0}', space=vmem, size = 0x2000, scoped, tag = 'input window, operand 0, single buffered']
    #allocation3 [shape = 's32[1]{0}', space=sflag, size = 0x4, scoped, tag = 'scoped memory for tpu_custom_call.1']
    #allocation4 [shape = 's32[1]{0}', space=sflag, size = 0x4, scoped, tag = 'scoped memory for tpu_custom_call.1']
    #allocation5 [shape = 'u8[8192]{0}', space=vmem, size = 0x2000, scoped, tag = 'input window, operand 1, single buffered']
    #allocation6 [shape = 's32[1]{0}', space=sflag, size = 0x4, scoped, tag = 'scoped memory for tpu_custom_call.1']
    #allocation7 [shape = 'u8[4096]{0}', space=vmem, size = 0x1000, scoped, tag = 'output window, operand 0, single buffered']
    %7 = vsyncpa [#allocation3], 0
    %8 = vsyncpa [#allocation6], 0
    %9 = vsyncpa [#allocation4], 0
    // Predicated region
    $region2: #{tpu_custom_call.1} parent=1 // pred_check
      _
    $region3: #{tpu_custom_call.1} parent=1 // pred_check_branch
      %11 = sbr.rel (0) target = $region5
    $region4: #{tpu_custom_call.1} parent=1 // pred_region
      %s12 = sadd.s32 0, 0
      %p13 = scmp.lt.s32.totalorder %s12, 0
      %s14 = scalar_select %p13, %s12, 0
      %s15 = smul.u32 2, %s14
      %s17 = ssub.s32 256, 256
      %18 = vsyncadd [#allocation3], %s17
      %s19 = smul.addr %s15, 128
      %s20 = scalar_lea.hbm %s0, %s19
      %s21 = sshll.u32 [#allocation2], 4
      %s22 = int_to_ptr.vmem [resolvable:$true] %s21
      %27 = dma.hbm_to_vmem [thread:$0]  %s20, 256, %s22, [#allocation3], 128, 128, 8
    $region5: #{tpu_custom_call.1} parent=1 // pred_fallthru
      _
    // Predicated region
    $region6: #{tpu_custom_call.1} parent=1 // pred_check
      _
    $region7: #{tpu_custom_call.1} parent=1 // pred_check_branch
      %29 = sbr.rel (0) target = $region9
    $region8: #{tpu_custom_call.1} parent=1 // pred_region
      %s30 = sadd.s32 0, 0
      %p31 = scmp.lt.s32.totalorder %s30, 0
      %s32 = scalar_select %p31, %s30, 0
      %s33 = smul.u32 2, %s32
      %s35 = ssub.s32 256, 256
      %36 = vsyncadd [#allocation6], %s35
      %s37 = smul.addr %s33, 128
      %s38 = scalar_lea.hbm %s1, %s37
      %s39 = sshll.u32 [#allocation5], 4
      %s40 = int_to_ptr.vmem [resolvable:$true] %s39
      %45 = dma.hbm_to_vmem [thread:$0]  %s38, 256, %s40, [#allocation6], 128, 128, 8
    $region9: #{tpu_custom_call.1} parent=1 // pred_fallthru
      _
    // Predicated region
    $region10: #{tpu_custom_call.1} parent=1 // pred_check
      _
    $region11: #{tpu_custom_call.1} parent=1 // pred_check_branch
      %47 = sbr.rel (0) target = $region13
    $region12: #{tpu_custom_call.1} parent=1 // pred_region
      %48 = dma.done [#allocation3], 256
    $region13: #{tpu_custom_call.1} parent=1 // pred_fallthru
      _
    // Predicated region
    $region14: #{tpu_custom_call.1} parent=1 // pred_check
      _
    $region15: #{tpu_custom_call.1} parent=1 // pred_check_branch
      %50 = sbr.rel (0) target = $region17
    $region16: #{tpu_custom_call.1} parent=1 // pred_region
      %51 = dma.done [#allocation6], 256
    $region17: #{tpu_custom_call.1} parent=1 // pred_fallthru
      _
    %s52 = sadd.s32 0, 0
    %p53 = scmp.lt.s32.totalorder %s52, 0
    %s54 = scalar_select %p53, %s52, 0
    %s55 = smul.u32 2, %s54
    %s56 = sadd.s32 0, 0
    %p57 = scmp.lt.s32.totalorder %s56, 0
    %s58 = scalar_select %p57, %s56, 0
    %s59 = smul.u32 2, %s58
    %p60 = scmp.eq.s32.totalorder 0, 0
    // Predicated region
    $region18: #{tpu_custom_call.1} parent=1 // pred_check
      %p61 = pneg %p60
    $region19: #{tpu_custom_call.1} parent=1 // pred_check_branch
      %63 = sbr.rel (%p61) target = $region21
    $region20: #{tpu_custom_call.1} parent=1 // pred_region
      %64 = vst [vmem:[#allocation7] sm:$0xff] 0.0
    $region21: #{tpu_custom_call.1} parent=1 // pred_fallthru
      _
    %v65 = vld [vmem:[#allocation2] sm:$0xff]
    %v66 = vld [vmem:[#allocation2 + $0x8] sm:$0xff]
    %v67 = vld [vmem:[#allocation5] sm:$0xff]
    %v68 = vld [vmem:[#allocation5 + $0x8] sm:$0xff]
    %v69 = vmul.f32 %v65, 0.5
    %v70 = vmul.f32 %v66, 0.5
    %v71 = vmul.f32 %v67, 0.5
    %v72 = vmul.f32 %v68, 0.5
    %vm73 = vcmask 261120
    %v74 = vsel %vm73, %v69, -inf
    %75 = vmax.xlane.f32.xlu0 %v74
    %v76 = vpop.xlane.xlu0 %75
    %v77 = vsel %vm73, %v70, -inf
    %78 = vmax.xlane.f32.xlu0 %v77
    %v79 = vpop.xlane.xlu0 %78
    %v80 = vsub.f32 %v69, %v76
    %v81 = vsub.f32 %v70, %v79
    %v82 = vsel %vm73, %v71, -inf
    %83 = vmax.xlane.f32.xlu0 %v82
    %v84 = vpop.xlane.xlu0 %83
    %v85 = vsel %vm73, %v72, -inf
    %86 = vmax.xlane.f32.xlu0 %v85
    %v87 = vpop.xlane.xlu0 %86
    %v88 = vsub.f32 %v71, %v84
    %v89 = vsub.f32 %v72, %v87
    %v90 = vmul.f32 %v80, 1.442695
    %v91 = vpow.pop %v90
    %v92 = vmul.f32 %v81, 1.442695
    %v93 = vpow.pop %v92
    %v94 = vsel %vm73, %v91, 0.0
    %95 = vadd.xlane.f32.xlu0 %v94
    %v96 = vpop.xlane.xlu0 %95
    %v97 = vsel %vm73, %v93, 0.0
    %98 = vadd.xlane.f32.xlu0 %v97
    %v99 = vpop.xlane.xlu0 %98
    %v100 = vmul.f32 %v88, 1.442695
    %v101 = vpow.pop %v100
    %v102 = vmul.f32 %v89, 1.442695
    %v103 = vpow.pop %v102
    %v104 = vsel %vm73, %v101, 0.0
    %105 = vadd.xlane.f32.xlu0 %v104
    %v106 = vpop.xlane.xlu0 %105
    %v107 = vsel %vm73, %v103, 0.0
    %108 = vadd.xlane.f32.xlu0 %v107
    %v109 = vpop.xlane.xlu0 %108
    %v110 = vsub.f32 %v80, %v88
    %v111 = vsub.f32 %v81, %v89
    %v112 = vmul.f32 %v91, %v110
    %v113 = vmul.f32 %v93, %v111
    %v114 = vsel %vm73, %v112, 0.0
    %115 = vadd.xlane.f32.xlu0 %v114
    %v116 = vpop.xlane.xlu0 %115
    %v117 = vsel %vm73, %v113, 0.0
    %118 = vadd.xlane.f32.xlu0 %v117
    %v119 = vpop.xlane.xlu0 %118
    %v120 = vrcp.pop %v96
    %v121 = vmul.f32 %v116, %v120
    %v122 = vrcp.pop %v99
    %v123 = vmul.f32 %v119, %v122
    %v124 = vlog2.pop %v96
    %v125 = vmul.f32 %v124, 0.6931472
    %v126 = vlog2.pop %v99
    %v127 = vmul.f32 %v126, 0.6931472
    %v128 = vsub.f32 %v121, %v125
    %v129 = vsub.f32 %v123, %v127
    %v130 = vlog2.pop %v106
    %v131 = vmul.f32 %v130, 0.6931472
    %v132 = vlog2.pop %v109
    %v133 = vmul.f32 %v132, 0.6931472
    %v134 = vadd.f32 %v128, %v131
    %v135 = vadd.f32 %v129, %v133
    %s136 = sadd.s32 0, 0
    %s137 = smul.u32 %s136, 16
    %v138 = vlaneseq
    %v139 = vshrl.u32 %v138, 7
    %v140 = vadd.s32 %v139, 8
    %v141 = vstv %s137
    %v142 = vadd.s32 %v141, %v139
    %v143 = vadd.s32 %v141, %v140
    %vm144 = vcmp.lt.s32.totalorder %v142, 16
    %vm145 = vcmp.lt.s32.totalorder %v143, 16
    %v146 = vsel %vm144, %v134, 0.0
    %v147 = vsel %vm145, %v135, 0.0
    %v148 = vld [vmem:[#allocation7] sm:$0xff]
    %vm149 = vcmask 7168
    %v150 = vsel %vm149, %v146, 0.0
    %v151 = vsel %vm149, %v147, 0.0
    %v152 = vadd.f32 %v150, %v151
    %153 = vadd.xlane.f32.xlu0 %v152
    %v154 = vpop.xlane.xlu0 %153
    %v155 = vrot.slane %v154, 4
    %v156 = vadd.f32 %v154, %v155
    %v157 = vrot.slane %v156, 2
    %v158 = vadd.f32 %v156, %v157
    %v159 = vrot.slane %v158, 1
    %v160 = vadd.f32 %v158, %v159
    %s161 = vtos %v160
    %v162 = vstv %s161
    %v163 = vadd.f32 %v148, %v162
    %164 = vst [vmem:[#allocation7] sm:$0xff] %v163
    // Predicated region
    $region22: #{tpu_custom_call.1} parent=1 // pred_check
      _
    $region23: #{tpu_custom_call.1} parent=1 // pred_check_branch
      %166 = sbr.rel (0) target = $region25
    $region24: #{tpu_custom_call.1} parent=1 // pred_region
      %s168 = ssub.s32 128, 128
      %169 = vsyncadd [#allocation4], %s168
      %s171 = sshll.u32 [#allocation7], 4
      %s172 = int_to_ptr.vmem [resolvable:$true] %s171
      %174 = dma.vmem_to_hbm [thread:$0]  %s172, 128, %s2, [#allocation4]
    $region25: #{tpu_custom_call.1} parent=1 // pred_fallthru
      _
    // Predicated region
    $region26: #{tpu_custom_call.1} parent=1 // pred_check
      _
    $region27: #{tpu_custom_call.1} parent=1 // pred_check_branch
      %176 = sbr.rel (0) target = $region29
    $region28: #{tpu_custom_call.1} parent=1 // pred_region
      %177 = dma.done [#allocation4], 128
    $region29: #{tpu_custom_call.1} parent=1 // pred_fallthru
      _
    %178 = vsyncpa [#allocation3], 1
    %179 = vsyncpa [#allocation6], 1
    %180 = vsyncpa [#allocation4], 1

</llo_original>
